<compile_context>
chip_gen: v6e
topology: v6e:2x2x1
jax: 0.10.0
libtpu: 0.0.40
codegen_flags: <defaults>
</compile_context>

<pallas_src>
import functools
import math

import jax
import jax.numpy as jnp
from jax.experimental import pallas as pl
from jax.experimental.pallas import tpu as pltpu

EPS = 1e-5
_MAX_BLOCK_ROWS = 8192
_LANE = 128


def _sublane_pack(dtype) -> int:
    itemsize = jnp.dtype(dtype).itemsize
    return {4: 8, 2: 16, 1: 32}.get(itemsize, 8)


def _vmem_budgets():
    """(vmem_limit_bytes, tile_budget_bytes) chosen per TPU generation."""
    cap = None
    try:
        info = pltpu.get_tpu_info()
        cap = int(getattr(info, "vmem_capacity_bytes", 0)) or None
    except Exception:
        cap = None
    if cap is None or cap < 128 * 1024 * 1024:
        # v7x-class (64 MiB/TC) or unknown: leave headroom for Mosaic internal
        # scratch, semaphores, and the f32 temporaries.
        return 48 * 1024 * 1024, 24 * 1024 * 1024
    # v5e / v6e (128 MiB VMEM): generous double-buffered budget.
    return 80 * 1024 * 1024, 48 * 1024 * 1024


def _pick_block_rows(rows: int, hidden_p: int, dtype, tile_budget: int) -> int:
    """Largest row tile fitting the VMEM budget, multiple of the sublane packing."""
    itemsize = jnp.dtype(dtype).itemsize
    sublane = _sublane_pack(dtype)
    # Per-row VMEM cost: double-buffered input + output tiles, plus ~3 f32 full-tile
    # working copies inside the kernel body (x upcast, centered, pre-downcast y).
    per_row_bytes = hidden_p * (2 * itemsize + 2 * itemsize + 3 * 4)
    br = tile_budget // max(per_row_bytes, 1)
    br = (br // sublane) * sublane
    br = max(sublane, min(_MAX_BLOCK_ROWS, br))
    # Never request a block much taller than the array: clamp to the largest sublane
    # multiple <= rows (partial last block is fine), or use the full dim if tiny.
    if rows >= sublane:
        br = min(br, (rows // sublane) * sublane)
    else:
        br = rows  # block dim == full array dim -> always legal
    return int(br)


def _ln_compute(x_ref, w_ref, b_ref, o_ref, *, hidden, padded):
    # x_ref: (block_rows, hidden_p); w_ref/b_ref: (1, hidden_p), already f32.
    x = x_ref[...].astype(jnp.float32)
    if padded:
        col = jax.lax.broadcasted_iota(jnp.int32, x.shape, 1)
        mask = col < hidden
        x = jnp.where(mask, x, 0.0)
    inv_n = jnp.float32(1.0 / hidden)                      # divide by REAL width
    mean = jnp.sum(x, axis=-1, keepdims=True) * inv_n
    centered = x - mean
    if padded:
        centered = jnp.where(mask, centered, 0.0)          # keep pad cols out of var
    var = jnp.sum(centered * centered, axis=-1, keepdims=True) * inv_n
    inv = jax.lax.rsqrt(var + jnp.float32(EPS))
    y = centered * (inv * w_ref[...])
    if b_ref is not None:
        y = y + b_ref[...]
    o_ref[...] = y.astype(o_ref.dtype)


def _ln_kernel_bias(x_ref, w_ref, b_ref, o_ref, *, hidden, padded):
    _ln_compute(x_ref, w_ref, b_ref, o_ref, hidden=hidden, padded=padded)


def _ln_kernel_nobias(x_ref, w_ref, o_ref, *, hidden, padded):
    _ln_compute(x_ref, w_ref, None, o_ref, hidden=hidden, padded=padded)


@functools.partial(jax.jit, static_argnames=("block_rows",))
def layer_norm(x, weight, bias=None, *, block_rows=None):
    """LayerNorm over the last axis of x with scale `weight` and optional `bias`."""
    orig_shape = x.shape
    hidden = orig_shape[-1]
    rows = math.prod(orig_shape[:-1]) if len(orig_shape) > 1 else 1
    x2 = x.reshape(rows, hidden)

    # Lane-dense last dim: pad hidden to a multiple of 128 (full unmasked vst stores).
    hidden_p = ((hidden + _LANE - 1) // _LANE) * _LANE
    padded = hidden_p != hidden
    if padded:
        x2 = jnp.pad(x2, ((0, 0), (0, hidden_p - hidden)))

    has_bias = bias is not None
    w2 = weight.astype(jnp.float32).reshape(1, hidden)
    if padded:
        w2 = jnp.pad(w2, ((0, 0), (0, hidden_p - hidden)))
    if has_bias:
        b2 = bias.astype(jnp.float32).reshape(1, hidden)
        if padded:
            b2 = jnp.pad(b2, ((0, 0), (0, hidden_p - hidden)))

    vmem_limit, tile_budget = _vmem_budgets()
    if block_rows is None:
        block_rows = _pick_block_rows(rows, hidden_p, x.dtype, tile_budget)

    grid = pl.cdiv(rows, block_rows)  # partial last block handled by Pallas clamping
    itemsize = jnp.dtype(x.dtype).itemsize

    kernel = functools.partial(
        _ln_kernel_bias if has_bias else _ln_kernel_nobias,
        hidden=hidden, padded=padded)

    data_spec = pl.BlockSpec((block_rows, hidden_p), lambda i: (i, 0))
    param_spec = pl.BlockSpec((1, hidden_p), lambda i: (0, 0))  # resident every step

    in_specs = [data_spec, param_spec] + ([param_spec] if has_bias else [])
    inputs = (x2, w2, b2) if has_bias else (x2, w2)

    out = pl.pallas_call(
        kernel,
        out_shape=jax.ShapeDtypeStruct((rows, hidden_p), x.dtype),
        grid_spec=pltpu.PrefetchScalarGridSpec(
            num_scalar_prefetch=0,
            grid=(grid,),
            in_specs=in_specs,
            out_specs=data_spec,
        ),
        compiler_params=pltpu.CompilerParams(
            dimension_semantics=("parallel",),   # rows are independent; shards over TCs
            vmem_limit_bytes=vmem_limit,
        ),
        cost_estimate=pl.CostEstimate(
            flops=7 * rows * hidden_p,
            transcendentals=rows,
            bytes_accessed=2 * rows * hidden_p * itemsize
                           + (1 + int(has_bias)) * hidden_p * 4,
        ),
    )(*inputs)

    if padded:
        out = out[:, :hidden]
    return out.reshape(orig_shape)


if __name__ == "__main__":
    key = jax.random.PRNGKey(0)
    batch, seq, hidden = 2, 8, 32  # small test shape; prod shapes keep hidden % 128 == 0

    x = jax.random.normal(key, (batch, seq, hidden), dtype=jnp.float32)

    # Deterministic parameter init (matches nn.Parameter(ones) / zeros in __init__).
    weight = jnp.ones((hidden,), dtype=jnp.float32)
    bias = jnp.zeros((hidden,), dtype=jnp.float32)  # module constructed with bias=True

    y = jax.block_until_ready(layer_norm(x, weight, bias))

    # Reference check against pure-JAX layer norm.
    mean = jnp.mean(x, axis=-1, keepdims=True)
    var = jnp.mean((x - mean) ** 2, axis=-1, keepdims=True)
    ref = (x - mean) / jnp.sqrt(var + EPS) * weight + bias
    assert jnp.allclose(y, ref, atol=1e-5, rtol=1e-5), "mismatch vs reference"

    # Module with bias=False -> dedicated no-bias kernel path.
    y_nb = jax.block_until_ready(layer_norm(x, weight, None))
    ref_nb = (x - mean) / jnp.sqrt(var + EPS) * weight
    assert jnp.allclose(y_nb, ref_nb, atol=1e-5, rtol=1e-5), "mismatch vs reference (no bias)"

    # Partial last block path: rows % block_rows != 0 (14 rows, block_rows=8).
    xp = jax.random.normal(jax.random.PRNGKey(1), (2, 7, hidden), dtype=jnp.float32)
    yp = jax.block_until_ready(layer_norm(xp, weight, bias, block_rows=8))
    meanp = jnp.mean(xp, axis=-1, keepdims=True)
    varp = jnp.mean((xp - meanp) ** 2, axis=-1, keepdims=True)
    refp = (xp - meanp) / jnp.sqrt(varp + EPS) * weight + bias
    assert jnp.allclose(yp, refp, atol=1e-5, rtol=1e-5), "mismatch vs reference (partial block)"

    print("KERNEL_OK")
</pallas_src>

<mosaic_0001>
module attributes {stable_mosaic.version = 11 : i64} {
  func.func @_ln_kernel_bias(%arg0: i32, %arg1: memref<16x128xf32, #tpu.memory_space<vmem>>, %arg2: memref<1x128xf32, #tpu.memory_space<vmem>>, %arg3: memref<1x128xf32, #tpu.memory_space<vmem>>, %arg4: memref<16x128xf32, #tpu.memory_space<vmem>>) attributes {dimension_semantics = [#tpu.dimension_semantics<parallel>], iteration_bounds = array<i64: 1>, scalar_prefetch = 0 : i64, scratch_operands = 0 : i64, tpu.core_type = #tpu.core_type<tc>, window_params = [{transform_indices = @transform_0, window_bounds = array<i64: 16, 128>}, {pipeline_mode = #tpu.pipeline_mode<synchronous>, transform_indices = @transform_1, window_bounds = array<i64: 1, 128>}, {pipeline_mode = #tpu.pipeline_mode<synchronous>, transform_indices = @transform_2, window_bounds = array<i64: 1, 128>}, {transform_indices = @transform_3, window_bounds = array<i64: 16, 128>}]} {
    %c0 = arith.constant 0 : index
    %c0_0 = arith.constant 0 : index
    %0 = vector.load %arg1[%c0, %c0_0] : memref<16x128xf32, #tpu.memory_space<vmem>>, vector<16x128xf32>
    %1 = tpu.iota {dimensions = array<i32: 1>} : vector<16x128xi32>
    %c32_i32 = arith.constant 32 : i32
    %2 = vector.broadcast %c32_i32 : i32 to vector<16x128xi32>
    %3 = arith.cmpi slt, %1, %2 : vector<16x128xi32>
    %cst = arith.constant 0.000000e+00 : f32
    %4 = vector.broadcast %cst : f32 to vector<16x128xf32>
    %5 = arith.select %3, %0, %4 : vector<16x128xi1>, vector<16x128xf32>
    %cst_1 = arith.constant dense<0.000000e+00> : vector<16xf32>
    %6 = vector.multi_reduction <add>, %5, %cst_1 [1] : vector<16x128xf32> to vector<16xf32>
    %7 = vector.shape_cast %6 : vector<16xf32> to vector<16x1xf32>
    %cst_2 = arith.constant 3.125000e-02 : f32
    %8 = vector.broadcast %cst_2 : f32 to vector<16x1xf32>
    %9 = arith.mulf %7, %8 : vector<16x1xf32>
    %10 = vector.broadcast %9 : vector<16x1xf32> to vector<16x128xf32>
    %11 = arith.subf %5, %10 : vector<16x128xf32>
    %cst_3 = arith.constant 0.000000e+00 : f32
    %12 = vector.broadcast %cst_3 : f32 to vector<16x128xf32>
    %13 = arith.select %3, %11, %12 : vector<16x128xi1>, vector<16x128xf32>
    %14 = arith.mulf %13, %13 : vector<16x128xf32>
    %cst_4 = arith.constant dense<0.000000e+00> : vector<16xf32>
    %15 = vector.multi_reduction <add>, %14, %cst_4 [1] : vector<16x128xf32> to vector<16xf32>
    %16 = vector.shape_cast %15 : vector<16xf32> to vector<16x1xf32>
    %cst_5 = arith.constant 3.125000e-02 : f32
    %17 = vector.broadcast %cst_5 : f32 to vector<16x1xf32>
    %18 = arith.mulf %16, %17 : vector<16x1xf32>
    %cst_6 = arith.constant 9.99999974E-6 : f32
    %19 = vector.broadcast %cst_6 : f32 to vector<16x1xf32>
    %20 = arith.addf %18, %19 : vector<16x1xf32>
    %21 = math.rsqrt %20 : vector<16x1xf32>
    %c0_7 = arith.constant 0 : index
    %c0_8 = arith.constant 0 : index
    %22 = vector.load %arg2[%c0_7, %c0_8] : memref<1x128xf32, #tpu.memory_space<vmem>>, vector<1x128xf32>
    %23 = vector.broadcast %21 : vector<16x1xf32> to vector<16x128xf32>
    %24 = vector.broadcast %22 : vector<1x128xf32> to vector<16x128xf32>
    %25 = arith.mulf %23, %24 : vector<16x128xf32>
    %26 = arith.mulf %13, %25 : vector<16x128xf32>
    %c0_9 = arith.constant 0 : index
    %c0_10 = arith.constant 0 : index
    %27 = vector.load %arg3[%c0_9, %c0_10] : memref<1x128xf32, #tpu.memory_space<vmem>>, vector<1x128xf32>
    %28 = vector.broadcast %27 : vector<1x128xf32> to vector<16x128xf32>
    %29 = arith.addf %26, %28 : vector<16x128xf32>
    %c0_11 = arith.constant 0 : index
    %c0_12 = arith.constant 0 : index
    %30 = vector.load %arg4[%c0_11, %c0_12] : memref<16x128xf32, #tpu.memory_space<vmem>>, vector<16x128xf32>
    tpu.vector_store %arg4[%c0_11, %c0_12], %29 {strides = array<i32>} : memref<16x128xf32, #tpu.memory_space<vmem>>, vector<16x128xf32>,
    return
  }
  func.func @transform_0(%arg0: i32) -> (i32, i32) {
    %c0_i32 = arith.constant 0 : i32
    %c0_i32_0 = arith.constant 0 : i32
    return %arg0, %c0_i32 : i32, i32
  }
  func.func @transform_1(%arg0: i32) -> (i32, i32) {
    %c0_i32 = arith.constant 0 : i32
    %c0_i32_0 = arith.constant 0 : i32
    %c0_i32_1 = arith.constant 0 : i32
    return %c0_i32, %c0_i32_0 : i32, i32
  }
  func.func @transform_2(%arg0: i32) -> (i32, i32) {
    %c0_i32 = arith.constant 0 : i32
    %c0_i32_0 = arith.constant 0 : i32
    %c0_i32_1 = arith.constant 0 : i32
    return %c0_i32, %c0_i32_0 : i32, i32
  }
  func.func @transform_3(%arg0: i32) -> (i32, i32) {
    %c0_i32 = arith.constant 0 : i32
    %c0_i32_0 = arith.constant 0 : i32
    return %arg0, %c0_i32 : i32, i32
  }
}

</mosaic_0001>

<llo_original>
// kernel: layer_norm.1
$region0: #{layer_norm.1}
  #allocation0 [shape = 'u32[]', space=smem, size = 0x4, offset = 0x4, fixed_abs, tag = 'smem constant byte address 0x4 - core index']
  #allocation1 [shape = 'u32[144,128]{1,0:T(1,128)}', space=vmem, size = 0x12000, scoped, tag = 'internal scratch']
  %s0 = inlined_call_operand.vmem [shape: f32[16,128], index: 0, kind: input, shape index: {}]
  %s1 = inlined_call_operand.vmem [shape: f32[1,128], index: 1, kind: input, shape index: {}]
  %s2 = inlined_call_operand.vmem [shape: f32[1,128], index: 2, kind: input, shape index: {}]
  %s3 = inlined_call_operand.vmem [shape: f32[16,128], index: 3, kind: output, shape index: {}]
  %s4 = sld [smem:[#allocation0]]
  $region22: #{layer_norm.1} parent=0
    _
  %s6 = ssub.s32 1, %s4
  %s7 = scalar_select 0, %s6, %s4
  // Predicated region
  $region2: #{layer_norm.1} parent=0 // pred_check
    _
  $region3: #{layer_norm.1} parent=0 // pred_check_branch
    %9 = sbr.rel (0) target = $region5
  $region4: #{layer_norm.1} parent=0 // pred_region
    _
  $region5: #{layer_norm.1} parent=0 // pred_fallthru
    _
  // Predicated region
  $region6: #{layer_norm.1} parent=0 // pred_check
    _
  $region7: #{layer_norm.1} parent=0 // pred_check_branch
    %11 = sbr.rel (0) target = $region9
  $region8: #{layer_norm.1} parent=0 // pred_region
    _
  $region9: #{layer_norm.1} parent=0 // pred_fallthru
    _
  // Predicated region
  $region10: #{layer_norm.1} parent=0 // pred_check
    _
  $region11: #{layer_norm.1} parent=0 // pred_check_branch
    %13 = sbr.rel (0) target = $region13
  $region12: #{layer_norm.1} parent=0 // pred_region
    _
  $region13: #{layer_norm.1} parent=0 // pred_fallthru
    _
  %v14 = vld [vmem:[%s0] sm:$0xff]
  %v15 = vld [vmem:[%s0 + $0x8] sm:$0xff]
  %v16 = vlaneseq
  %v17 = vand.u32 %v16, 127
  %vm18 = vcmp.lt.s32.totalorder %v17, 32
  %v19 = vsel %vm18, %v14, 0.0
  %v20 = vsel %vm18, %v15, 0.0
  %21 = vadd.xlane.f32.xlu0 %v19
  %v22 = vpop.xlane.xlu0 %21
  %23 = vadd.xlane.f32.xlu0 %v20
  %v24 = vpop.xlane.xlu0 %23
  %v25 = vmul.f32 %v22, 0.03125
  %v26 = vmul.f32 %v24, 0.03125
  %v27 = vsub.f32 %v19, %v25
  %v28 = vsub.f32 %v20, %v26
  %v29 = vsel %vm18, %v27, 0.0
  %v30 = vsel %vm18, %v28, 0.0
  %v31 = vmul.f32 %v29, %v29
  %v32 = vmul.f32 %v30, %v30
  %33 = vadd.xlane.f32.xlu0 %v31
  %v34 = vpop.xlane.xlu0 %33
  %35 = vadd.xlane.f32.xlu0 %v32
  %v36 = vpop.xlane.xlu0 %35
  %v37 = vmul.f32 %v34, 0.03125
  %v38 = vmul.f32 %v36, 0.03125
  %v39 = vadd.f32 %v37, 1e-05
  %v40 = vadd.f32 %v38, 1e-05
  %v41 = vrsqrt.pop %v39
  %v42 = vrsqrt.pop %v40
  %v43 = vld [vmem:[%s1] sm:$0x1]
  %v45 = vlaneseq
  %v46 = vshrl.u32 %v45, 7
  %v47 = vsub.s32 0, %v46
  %v48 = vrot.slane %v43, %v47
  %v50 = vmul.f32 %v41, %v48
  %v51 = vmul.f32 %v42, %v48
  %v52 = vmul.f32 %v29, %v50
  %v53 = vmul.f32 %v30, %v51
  %v54 = vld [vmem:[%s2] sm:$0x1]
  %v56 = vlaneseq
  %v57 = vshrl.u32 %v56, 7
  %v58 = vsub.s32 0, %v57
  %v59 = vrot.slane %v54, %v58
  %v61 = vadd.f32 %v52, %v59
  %v62 = vadd.f32 %v53, %v59
  %63 = vst [vmem:[%s3] sm:$0xff] %v61
  %64 = vst [vmem:[%s3 + $0x8] sm:$0xff] %v62
  // Predicated region
  $region14: #{layer_norm.1} parent=0 // pred_check
    _
  $region15: #{layer_norm.1} parent=0 // pred_check_branch
    %66 = sbr.rel (0) target = $region17
  $region16: #{layer_norm.1} parent=0 // pred_region
    _
  $region17: #{layer_norm.1} parent=0 // pred_fallthru
    _
  // Predicated region
  $region18: #{layer_norm.1} parent=0 // pred_check
    _
  $region19: #{layer_norm.1} parent=0 // pred_check_branch
    %68 = sbr.rel (0) target = $region21
  $region20: #{layer_norm.1} parent=0 // pred_region
    _
  $region21: #{layer_norm.1} parent=0 // pred_fallthru
    _

</llo_original>
